<compile_context>
chip_gen: v7x
topology: tpu7x:2x2x1
jax: 0.10.0
libtpu: 0.0.40
codegen_flags: <defaults>
</compile_context>

<pallas_src>
import jax
import jax.numpy as jnp
from jax.experimental import pallas as pl
from jax.experimental.pallas import tpu as pltpu

# ---- model dims (from MLP_ConClassfier.__init__) ----
NUM_INPUTS = 41
NUM_HIDDENS_1 = 512
NUM_HIDDENS_2 = 128
NUM_HIDDENS_3 = 32
NUM_OUTPUTS = 5
NUM_PROJ_HIDDEN = 32

BATCH_TILE = 1024   # max rows per grid step (few-MiB/tile; fits v7x's tighter VMEM too)


def _cdiv(a, b):
    return (a + b - 1) // b


def _round_up(x, m):
    return _cdiv(x, m) * m


def _mlp_kernel(x_ref,
                w1_ref, b1_ref,
                w2_ref, b2_ref,
                w3_ref, b3_ref,
                wf1_ref, bf1_ref,
                wf2_ref, bf2_ref,
                wc_ref, bc_ref,
                pred_ref, z_ref):
    """One batch tile of the whole forward pass; weights are VMEM-resident."""
    cdt = w1_ref.dtype  # matmul operand dtype (f32 or bf16); accumulation is always f32

    x = x_ref[...].astype(cdt)

    # trunk: Linear -> ReLU -> Linear -> ReLU -> Linear
    h = jnp.dot(x, w1_ref[...], preferred_element_type=jnp.float32) + b1_ref[...]
    h = jnp.maximum(h, 0.0)
    h = jnp.dot(h.astype(cdt), w2_ref[...], preferred_element_type=jnp.float32) + b2_ref[...]
    h = jnp.maximum(h, 0.0)
    before = jnp.dot(h.astype(cdt), w3_ref[...], preferred_element_type=jnp.float32) + b3_ref[...]
    before_c = before.astype(cdt)

    # projection head: z = fc2(relu(fc1(before)))
    p = jnp.dot(before_c, wf1_ref[...], preferred_element_type=jnp.float32) + bf1_ref[...]
    p = jnp.maximum(p, 0.0)
    z_ref[...] = (jnp.dot(p.astype(cdt), wf2_ref[...], preferred_element_type=jnp.float32)
                  + bf2_ref[...])

    # classifier head: predict = relu(linearclassifier(before))  (f32 all the way)
    pred_ref[...] = jnp.maximum(
        jnp.dot(before_c, wc_ref[...], preferred_element_type=jnp.float32) + bc_ref[...], 0.0)


def prepare_params(params, weight_dtype=jnp.float32):
    """One-time weight preparation (hoisted out of the per-call hot path).

    weight_dtype=jnp.bfloat16 casts matmul operands to bf16 (f32 accumulation) —
    recommended on v5e (bf16-native MXU), good throughput default on v6e/v7x.
    Biases stay float32.
    """
    wd = jnp.dtype(weight_dtype)
    return (
        params["w1"].astype(wd), params["b1"].astype(jnp.float32),
        params["w2"].astype(wd), params["b2"].astype(jnp.float32),
        params["w3"].astype(wd), params["b3"].astype(jnp.float32),
        params["wf1"].astype(wd), params["bf1"].astype(jnp.float32),
        params["wf2"].astype(wd), params["bf2"].astype(jnp.float32),
        params["wc"].astype(wd), params["bc"].astype(jnp.float32),
    )


def _choose_tiling(batch):
    """Adaptive batch tiling: near-even split, even step count (>=2) when batch >= 16
    so v7x's two TensorCores both get work; pad waste bounded to < 8 rows per step."""
    n_steps = max(_cdiv(batch, BATCH_TILE), 1)
    if batch >= 16:
        n_steps = max(n_steps, 2)
        if n_steps % 2:
            n_steps += 1
    tb = _round_up(_cdiv(batch, n_steps), 8)
    b_pad = _round_up(batch, tb)
    return tb, b_pad


@jax.jit
def mlp_conclassifier_forward(x, fused_params):
    """x: (B, 41) float32 (or bfloat16). fused_params: output of prepare_params()."""
    batch = x.shape[0]
    tb, b_pad = _choose_tiling(batch)

    x_p = x if b_pad == batch else jnp.pad(x, ((0, b_pad - batch), (0, 0)))

    # activations tiled over batch; weights constant (VMEM-resident, single DMA)
    in_specs = [pl.BlockSpec((tb, NUM_INPUTS), lambda i: (i, 0))] + \
               [pl.BlockSpec(w.shape, lambda i: (0, 0)) for w in fused_params]
    out_specs = [pl.BlockSpec((tb, NUM_OUTPUTS), lambda i: (i, 0)),
                 pl.BlockSpec((tb, NUM_HIDDENS_3), lambda i: (i, 0))]

    # advisory cost estimate for XLA scheduling
    weight_macs = (NUM_INPUTS * NUM_HIDDENS_1 + NUM_HIDDENS_1 * NUM_HIDDENS_2 +
                   NUM_HIDDENS_2 * NUM_HIDDENS_3 + NUM_HIDDENS_3 * NUM_PROJ_HIDDEN +
                   NUM_PROJ_HIDDEN * NUM_HIDDENS_3 + NUM_HIDDENS_3 * NUM_OUTPUTS)
    weight_bytes = sum(int(w.size) * w.dtype.itemsize for w in fused_params)
    io_bytes = b_pad * (NUM_INPUTS * x_p.dtype.itemsize + (NUM_OUTPUTS + NUM_HIDDENS_3) * 4)
    cost = pl.CostEstimate(flops=2 * b_pad * weight_macs,
                           transcendentals=0,
                           bytes_accessed=io_bytes + weight_bytes)

    predict, z = pl.pallas_call(
        _mlp_kernel,
        grid=(b_pad // tb,),
        out_shape=(jax.ShapeDtypeStruct((b_pad, NUM_OUTPUTS), jnp.float32),
                   jax.ShapeDtypeStruct((b_pad, NUM_HIDDENS_3), jnp.float32)),
        in_specs=in_specs,
        out_specs=out_specs,
        compiler_params=pltpu.CompilerParams(
            dimension_semantics=("parallel",),   # 2-TC sharding on v7x; harmless elsewhere
            vmem_limit_bytes=32 << 20,
        ),
        cost_estimate=cost,
    )(x_p, *fused_params)

    if b_pad != batch:
        predict = predict[:batch]
        z = z[:batch]
    return predict, z


def init_params(key):
    """Deterministic synthetic init (PyTorch-Linear-style uniform bounds).

    Weights stored transposed as (in, out) so y = x @ W + b == PyTorch x @ W_pt.T + b.
    Biases stored as (1, out).
    """
    dims = {
        "1": (NUM_INPUTS, NUM_HIDDENS_1),
        "2": (NUM_HIDDENS_1, NUM_HIDDENS_2),
        "3": (NUM_HIDDENS_2, NUM_HIDDENS_3),
        "f1": (NUM_HIDDENS_3, NUM_PROJ_HIDDEN),
        "f2": (NUM_PROJ_HIDDEN, NUM_HIDDENS_3),
        "c": (NUM_HIDDENS_3, NUM_OUTPUTS),
    }
    params = {}
    for name, (fan_in, fan_out) in dims.items():
        key, kw, kb = jax.random.split(key, 3)
        bound = 1.0 / jnp.sqrt(fan_in)
        params["w" + name] = jax.random.uniform(
            kw, (fan_in, fan_out), jnp.float32, -bound, bound)
        params["b" + name] = jax.random.uniform(
            kb, (1, fan_out), jnp.float32, -bound, bound)
    return params


def _reference_forward(x, p):
    """Plain-JAX reference (mirrors the PyTorch forward)."""
    h = jnp.maximum(x @ p["w1"] + p["b1"], 0.0)
    h = jnp.maximum(h @ p["w2"] + p["b2"], 0.0)
    before = h @ p["w3"] + p["b3"]
    z = jnp.maximum(before @ p["wf1"] + p["bf1"], 0.0) @ p["wf2"] + p["bf2"]
    predict = jnp.maximum(before @ p["wc"] + p["bc"], 0.0)
    return predict, z


if __name__ == "__main__":
    key = jax.random.PRNGKey(0)
    key, kx1, kx2 = jax.random.split(key, 3)
    params = init_params(key)
    fused_f32 = prepare_params(params)                       # one-time, out of hot path

    # small primary check (single grid step)
    batch = 8
    x = jax.random.normal(kx1, (batch, NUM_INPUTS), jnp.float32)
    predict, z = mlp_conclassifier_forward(x, fused_f32)
    jax.block_until_ready((predict, z))
    ref_predict, ref_z = _reference_forward(x, params)
    assert predict.shape == (batch, NUM_OUTPUTS)
    assert z.shape == (batch, NUM_HIDDENS_3)
    assert jnp.allclose(predict, ref_predict, atol=1e-4, rtol=1e-4)
    assert jnp.allclose(z, ref_z, atol=1e-4, rtol=1e-4)

    # multi-tile grid check (exercises adaptive tiling, forced 2-step grid, batch padding)
    batch2 = 520
    x2 = jax.random.normal(kx2, (batch2, NUM_INPUTS), jnp.float32)
    predict2, z2 = mlp_conclassifier_forward(x2, fused_f32)
    jax.block_until_ready((predict2, z2))
    ref_predict2, ref_z2 = _reference_forward(x2, params)
    assert predict2.shape == (batch2, NUM_OUTPUTS)
    assert z2.shape == (batch2, NUM_HIDDENS_3)
    assert jnp.allclose(predict2, ref_predict2, atol=1e-4, rtol=1e-4)
    assert jnp.allclose(z2, ref_z2, atol=1e-4, rtol=1e-4)

    # bf16 matmul-operand path (f32 accumulation) — recommended on v5e/v6e/v7x MXUs
    fused_bf16 = prepare_params(params, weight_dtype=jnp.bfloat16)
    predict_bf, z_bf = mlp_conclassifier_forward(x, fused_bf16)
    jax.block_until_ready((predict_bf, z_bf))
    assert jnp.allclose(predict_bf, ref_predict, atol=5e-2, rtol=5e-2)
    assert jnp.allclose(z_bf, ref_z, atol=5e-2, rtol=5e-2)

    print("KERNEL_OK")
</pallas_src>

<mosaic_0001>
module attributes {stable_mosaic.version = 11 : i64} {
  func.func @_mlp_kernel(%arg0: i32, %arg1: memref<8x41xf32, #tpu.memory_space<vmem>>, %arg2: memref<41x512xf32, #tpu.memory_space<vmem>>, %arg3: memref<1x512xf32, #tpu.memory_space<vmem>>, %arg4: memref<512x128xf32, #tpu.memory_space<vmem>>, %arg5: memref<1x128xf32, #tpu.memory_space<vmem>>, %arg6: memref<128x32xf32, #tpu.memory_space<vmem>>, %arg7: memref<1x32xf32, #tpu.memory_space<vmem>>, %arg8: memref<32x32xf32, #tpu.memory_space<vmem>>, %arg9: memref<1x32xf32, #tpu.memory_space<vmem>>, %arg10: memref<32x32xf32, #tpu.memory_space<vmem>>, %arg11: memref<1x32xf32, #tpu.memory_space<vmem>>, %arg12: memref<32x5xf32, #tpu.memory_space<vmem>>, %arg13: memref<1x5xf32, #tpu.memory_space<vmem>>, %arg14: memref<8x5xf32, #tpu.memory_space<vmem>>, %arg15: memref<8x32xf32, #tpu.memory_space<vmem>>) attributes {dimension_semantics = [#tpu.dimension_semantics<parallel>], iteration_bounds = array<i64: 1>, scalar_prefetch = 0 : i64, scratch_operands = 0 : i64, tpu.core_type = #tpu.core_type<tc>, window_params = [{transform_indices = @transform_0, window_bounds = array<i64: 8, 41>}, {pipeline_mode = #tpu.pipeline_mode<synchronous>, transform_indices = @transform_1, window_bounds = array<i64: 41, 512>}, {pipeline_mode = #tpu.pipeline_mode<synchronous>, transform_indices = @transform_2, window_bounds = array<i64: 1, 512>}, {pipeline_mode = #tpu.pipeline_mode<synchronous>, transform_indices = @transform_3, window_bounds = array<i64: 512, 128>}, {pipeline_mode = #tpu.pipeline_mode<synchronous>, transform_indices = @transform_4, window_bounds = array<i64: 1, 128>}, {pipeline_mode = #tpu.pipeline_mode<synchronous>, transform_indices = @transform_5, window_bounds = array<i64: 128, 32>}, {pipeline_mode = #tpu.pipeline_mode<synchronous>, transform_indices = @transform_6, window_bounds = array<i64: 1, 32>}, {pipeline_mode = #tpu.pipeline_mode<synchronous>, transform_indices = @transform_7, window_bounds = array<i64: 32, 32>}, {pipeline_mode = #tpu.pipeline_mode<synchronous>, transform_indices = @transform_8, window_bounds = array<i64: 1, 32>}, {pipeline_mode = #tpu.pipeline_mode<synchronous>, transform_indices = @transform_9, window_bounds = array<i64: 32, 32>}, {pipeline_mode = #tpu.pipeline_mode<synchronous>, transform_indices = @transform_10, window_bounds = array<i64: 1, 32>}, {pipeline_mode = #tpu.pipeline_mode<synchronous>, transform_indices = @transform_11, window_bounds = array<i64: 32, 5>}, {pipeline_mode = #tpu.pipeline_mode<synchronous>, transform_indices = @transform_12, window_bounds = array<i64: 1, 5>}, {transform_indices = @transform_13, window_bounds = array<i64: 8, 5>}, {transform_indices = @transform_14, window_bounds = array<i64: 8, 32>}]} {
    %c0 = arith.constant 0 : index
    %c0_0 = arith.constant 0 : index
    %0 = vector.load %arg1[%c0, %c0_0] : memref<8x41xf32, #tpu.memory_space<vmem>>, vector<8x41xf32>
    %c0_1 = arith.constant 0 : index
    %c0_2 = arith.constant 0 : index
    %1 = vector.load %arg2[%c0_1, %c0_2] : memref<41x512xf32, #tpu.memory_space<vmem>>, vector<41x512xf32>
    %cst = arith.constant dense<0.000000e+00> : vector<8x512xf32>
    %2 = tpu.matmul %0, %1, %cst {dimension_numbers = #tpu.dot_dimension_numbers<[1], [0], [0], [1], [0, 0, 1, 1], [], []>} : vector<8x41xf32>, vector<41x512xf32>, vector<8x512xf32> -> vector<8x512xf32>
    %c0_3 = arith.constant 0 : index
    %c0_4 = arith.constant 0 : index
    %3 = vector.load %arg3[%c0_3, %c0_4] : memref<1x512xf32, #tpu.memory_space<vmem>>, vector<1x512xf32>
    %4 = vector.broadcast %3 : vector<1x512xf32> to vector<8x512xf32>
    %5 = arith.addf %2, %4 : vector<8x512xf32>
    %cst_5 = arith.constant 0.000000e+00 : f32
    %6 = vector.broadcast %cst_5 : f32 to vector<8x512xf32>
    %7 = arith.maximumf %5, %6 : vector<8x512xf32>
    %c0_6 = arith.constant 0 : index
    %c0_7 = arith.constant 0 : index
    %8 = vector.load %arg4[%c0_6, %c0_7] : memref<512x128xf32, #tpu.memory_space<vmem>>, vector<512x128xf32>
    %cst_8 = arith.constant dense<0.000000e+00> : vector<8x128xf32>
    %9 = tpu.matmul %7, %8, %cst_8 {dimension_numbers = #tpu.dot_dimension_numbers<[1], [0], [0], [1], [0, 0, 1, 1], [], []>} : vector<8x512xf32>, vector<512x128xf32>, vector<8x128xf32> -> vector<8x128xf32>
    %c0_9 = arith.constant 0 : index
    %c0_10 = arith.constant 0 : index
    %10 = vector.load %arg5[%c0_9, %c0_10] : memref<1x128xf32, #tpu.memory_space<vmem>>, vector<1x128xf32>
    %11 = vector.broadcast %10 : vector<1x128xf32> to vector<8x128xf32>
    %12 = arith.addf %9, %11 : vector<8x128xf32>
    %cst_11 = arith.constant 0.000000e+00 : f32
    %13 = vector.broadcast %cst_11 : f32 to vector<8x128xf32>
    %14 = arith.maximumf %12, %13 : vector<8x128xf32>
    %c0_12 = arith.constant 0 : index
    %c0_13 = arith.constant 0 : index
    %15 = vector.load %arg6[%c0_12, %c0_13] : memref<128x32xf32, #tpu.memory_space<vmem>>, vector<128x32xf32>
    %cst_14 = arith.constant dense<0.000000e+00> : vector<8x32xf32>
    %16 = tpu.matmul %14, %15, %cst_14 {dimension_numbers = #tpu.dot_dimension_numbers<[1], [0], [0], [1], [0, 0, 1, 1], [], []>} : vector<8x128xf32>, vector<128x32xf32>, vector<8x32xf32> -> vector<8x32xf32>
    %c0_15 = arith.constant 0 : index
    %c0_16 = arith.constant 0 : index
    %17 = vector.load %arg7[%c0_15, %c0_16] : memref<1x32xf32, #tpu.memory_space<vmem>>, vector<1x32xf32>
    %18 = vector.broadcast %17 : vector<1x32xf32> to vector<8x32xf32>
    %19 = arith.addf %16, %18 : vector<8x32xf32>
    %c0_17 = arith.constant 0 : index
    %c0_18 = arith.constant 0 : index
    %20 = vector.load %arg8[%c0_17, %c0_18] : memref<32x32xf32, #tpu.memory_space<vmem>>, vector<32x32xf32>
    %cst_19 = arith.constant dense<0.000000e+00> : vector<8x32xf32>
    %21 = tpu.matmul %19, %20, %cst_19 {dimension_numbers = #tpu.dot_dimension_numbers<[1], [0], [0], [1], [0, 0, 1, 1], [], []>} : vector<8x32xf32>, vector<32x32xf32>, vector<8x32xf32> -> vector<8x32xf32>
    %c0_20 = arith.constant 0 : index
    %c0_21 = arith.constant 0 : index
    %22 = vector.load %arg9[%c0_20, %c0_21] : memref<1x32xf32, #tpu.memory_space<vmem>>, vector<1x32xf32>
    %23 = vector.broadcast %22 : vector<1x32xf32> to vector<8x32xf32>
    %24 = arith.addf %21, %23 : vector<8x32xf32>
    %cst_22 = arith.constant 0.000000e+00 : f32
    %25 = vector.broadcast %cst_22 : f32 to vector<8x32xf32>
    %26 = arith.maximumf %24, %25 : vector<8x32xf32>
    %c0_23 = arith.constant 0 : index
    %c0_24 = arith.constant 0 : index
    %27 = vector.load %arg10[%c0_23, %c0_24] : memref<32x32xf32, #tpu.memory_space<vmem>>, vector<32x32xf32>
    %cst_25 = arith.constant dense<0.000000e+00> : vector<8x32xf32>
    %28 = tpu.matmul %26, %27, %cst_25 {dimension_numbers = #tpu.dot_dimension_numbers<[1], [0], [0], [1], [0, 0, 1, 1], [], []>} : vector<8x32xf32>, vector<32x32xf32>, vector<8x32xf32> -> vector<8x32xf32>
    %c0_26 = arith.constant 0 : index
    %c0_27 = arith.constant 0 : index
    %29 = vector.load %arg11[%c0_26, %c0_27] : memref<1x32xf32, #tpu.memory_space<vmem>>, vector<1x32xf32>
    %30 = vector.broadcast %29 : vector<1x32xf32> to vector<8x32xf32>
    %31 = arith.addf %28, %30 : vector<8x32xf32>
    %c0_28 = arith.constant 0 : index
    %c0_29 = arith.constant 0 : index
    %32 = vector.load %arg15[%c0_28, %c0_29] : memref<8x32xf32, #tpu.memory_space<vmem>>, vector<8x32xf32>
    tpu.vector_store %arg15[%c0_28, %c0_29], %31 {strides = array<i32>} : memref<8x32xf32, #tpu.memory_space<vmem>>, vector<8x32xf32>,
    %c0_30 = arith.constant 0 : index
    %c0_31 = arith.constant 0 : index
    %33 = vector.load %arg12[%c0_30, %c0_31] : memref<32x5xf32, #tpu.memory_space<vmem>>, vector<32x5xf32>
    %cst_32 = arith.constant dense<0.000000e+00> : vector<8x5xf32>
    %34 = tpu.matmul %19, %33, %cst_32 {dimension_numbers = #tpu.dot_dimension_numbers<[1], [0], [0], [1], [0, 0, 1, 1], [], []>} : vector<8x32xf32>, vector<32x5xf32>, vector<8x5xf32> -> vector<8x5xf32>
    %c0_33 = arith.constant 0 : index
    %c0_34 = arith.constant 0 : index
    %35 = vector.load %arg13[%c0_33, %c0_34] : memref<1x5xf32, #tpu.memory_space<vmem>>, vector<1x5xf32>
    %36 = vector.broadcast %35 : vector<1x5xf32> to vector<8x5xf32>
    %37 = arith.addf %34, %36 : vector<8x5xf32>
    %cst_35 = arith.constant 0.000000e+00 : f32
    %38 = vector.broadcast %cst_35 : f32 to vector<8x5xf32>
    %39 = arith.maximumf %37, %38 : vector<8x5xf32>
    %c0_36 = arith.constant 0 : index
    %c0_37 = arith.constant 0 : index
    %40 = vector.load %arg14[%c0_36, %c0_37] : memref<8x5xf32, #tpu.memory_space<vmem>>, vector<8x5xf32>
    tpu.vector_store %arg14[%c0_36, %c0_37], %39 {strides = array<i32>} : memref<8x5xf32, #tpu.memory_space<vmem>>, vector<8x5xf32>,
    return
  }
  func.func @transform_0(%arg0: i32) -> (i32, i32) {
    %c0_i32 = arith.constant 0 : i32
    %c0_i32_0 = arith.constant 0 : i32
    return %arg0, %c0_i32 : i32, i32
  }
  func.func @transform_1(%arg0: i32) -> (i32, i32) {
    %c0_i32 = arith.constant 0 : i32
    %c0_i32_0 = arith.constant 0 : i32
    %c0_i32_1 = arith.constant 0 : i32
    return %c0_i32, %c0_i32_0 : i32, i32
  }
  func.func @transform_2(%arg0: i32) -> (i32, i32) {
    %c0_i32 = arith.constant 0 : i32
    %c0_i32_0 = arith.constant 0 : i32
    %c0_i32_1 = arith.constant 0 : i32
    return %c0_i32, %c0_i32_0 : i32, i32
  }
  func.func @transform_3(%arg0: i32) -> (i32, i32) {
    %c0_i32 = arith.constant 0 : i32
    %c0_i32_0 = arith.constant 0 : i32
    %c0_i32_1 = arith.constant 0 : i32
    return %c0_i32, %c0_i32_0 : i32, i32
  }
  func.func @transform_4(%arg0: i32) -> (i32, i32) {
    %c0_i32 = arith.constant 0 : i32
    %c0_i32_0 = arith.constant 0 : i32
    %c0_i32_1 = arith.constant 0 : i32
    return %c0_i32, %c0_i32_0 : i32, i32
  }
  func.func @transform_5(%arg0: i32) -> (i32, i32) {
    %c0_i32 = arith.constant 0 : i32
    %c0_i32_0 = arith.constant 0 : i32
    %c0_i32_1 = arith.constant 0 : i32
    return %c0_i32, %c0_i32_0 : i32, i32
  }
  func.func @transform_6(%arg0: i32) -> (i32, i32) {
    %c0_i32 = arith.constant 0 : i32
    %c0_i32_0 = arith.constant 0 : i32
    %c0_i32_1 = arith.constant 0 : i32
    return %c0_i32, %c0_i32_0 : i32, i32
  }
  func.func @transform_7(%arg0: i32) -> (i32, i32) {
    %c0_i32 = arith.constant 0 : i32
    %c0_i32_0 = arith.constant 0 : i32
    %c0_i32_1 = arith.constant 0 : i32
    return %c0_i32, %c0_i32_0 : i32, i32
  }
  func.func @transform_8(%arg0: i32) -> (i32, i32) {
    %c0_i32 = arith.constant 0 : i32
    %c0_i32_0 = arith.constant 0 : i32
    %c0_i32_1 = arith.constant 0 : i32
    return %c0_i32, %c0_i32_0 : i32, i32
  }
  func.func @transform_9(%arg0: i32) -> (i32, i32) {
    %c0_i32 = arith.constant 0 : i32
    %c0_i32_0 = arith.constant 0 : i32
    %c0_i32_1 = arith.constant 0 : i32
    return %c0_i32, %c0_i32_0 : i32, i32
  }
  func.func @transform_10(%arg0: i32) -> (i32, i32) {
    %c0_i32 = arith.constant 0 : i32
    %c0_i32_0 = arith.constant 0 : i32
    %c0_i32_1 = arith.constant 0 : i32
    return %c0_i32, %c0_i32_0 : i32, i32
  }
  func.func @transform_11(%arg0: i32) -> (i32, i32) {
    %c0_i32 = arith.constant 0 : i32
    %c0_i32_0 = arith.constant 0 : i32
    %c0_i32_1 = arith.constant 0 : i32
    return %c0_i32, %c0_i32_0 : i32, i32
  }
  func.func @transform_12(%arg0: i32) -> (i32, i32) {
    %c0_i32 = arith.constant 0 : i32
    %c0_i32_0 = arith.constant 0 : i32
    %c0_i32_1 = arith.constant 0 : i32
    return %c0_i32, %c0_i32_0 : i32, i32
  }
  func.func @transform_13(%arg0: i32) -> (i32, i32) {
    %c0_i32 = arith.constant 0 : i32
    %c0_i32_0 = arith.constant 0 : i32
    return %arg0, %c0_i32 : i32, i32
  }
  func.func @transform_14(%arg0: i32) -> (i32, i32) {
    %c0_i32 = arith.constant 0 : i32
    %c0_i32_0 = arith.constant 0 : i32
    return %arg0, %c0_i32 : i32, i32
  }
}

</mosaic_0001>

<llo_original>
// kernel: mlp_conclassifier_forward.1
$region0: #{mlp_conclassifier_forward.1}
  #allocation0 [shape = 'u32[]', space=smem, size = 0x4, offset = 0x4, fixed_abs, tag = 'smem constant byte address 0x4 - core index']
  #allocation1 [shape = 'u32[144,128]{1,0:T(1,128)}', space=vmem, size = 0x12000, scoped, tag = 'internal scratch']
  %s0 = inlined_call_operand.hbm [shape: f32[8,41], index: 0, kind: input, shape index: {}]
  %s1 = inlined_call_operand.vmem [shape: f32[41,512], index: 1, kind: input, shape index: {}]
  %s2 = inlined_call_operand.hbm [shape: f32[1,512], index: 2, kind: input, shape index: {}]
  %s3 = inlined_call_operand.hbm [shape: f32[512,128], index: 3, kind: input, shape index: {}]
  %s4 = inlined_call_operand.vmem [shape: f32[1,128], index: 4, kind: input, shape index: {}]
  %s5 = inlined_call_operand.vmem [shape: f32[128,32], index: 5, kind: input, shape index: {}]
  %s6 = inlined_call_operand.vmem [shape: f32[1,32], index: 6, kind: input, shape index: {}]
  %s7 = inlined_call_operand.vmem [shape: f32[32,32], index: 7, kind: input, shape index: {}]
  %s8 = inlined_call_operand.hbm [shape: f32[1,32], index: 8, kind: input, shape index: {}]
  %s9 = inlined_call_operand.hbm [shape: f32[32,32], index: 9, kind: input, shape index: {}]
  %s10 = inlined_call_operand.vmem [shape: f32[1,32], index: 10, kind: input, shape index: {}]
  %s11 = inlined_call_operand.vmem [shape: f32[32,5], index: 11, kind: input, shape index: {}]
  %s12 = inlined_call_operand.vmem [shape: f32[1,5], index: 12, kind: input, shape index: {}]
  %s13 = inlined_call_operand.hbm [shape: f32[8,5], index: 13, kind: output, shape index: {0}]
  %s14 = inlined_call_operand.hbm [shape: f32[8,32], index: 14, kind: output, shape index: {1}]
  %15 = xla_tuple %s13, %s14
  %s16 = sld [smem:[#allocation0]]
  $region90: #{mlp_conclassifier_forward.1} parent=0
    _
  %s18 = ssub.s32 1, %s16
  %s19 = scalar_select 0, %s18, %s16
  $region1: #{mlp_conclassifier_forward.1} parent=0
    #allocation2 [shape = 'u8[4096]{0}', space=vmem, size = 0x1000, scoped, tag = 'input window, operand 0, single buffered']
    #allocation3 [shape = 's32[1]{0}', space=sflag, size = 0x4, scoped, tag = 'scoped memory for mlp_conclassifier_forward.1']
    #allocation4 [shape = 's32[1]{0}', space=sflag, size = 0x4, scoped, tag = 'scoped memory for mlp_conclassifier_forward.1']
    #allocation5 [shape = 'u8[2048]{0}', space=vmem, size = 0x800, scoped, tag = 'input window, operand 2, single buffered']
    #allocation6 [shape = 's32[1]{0}', space=sflag, size = 0x4, scoped, tag = 'scoped memory for mlp_conclassifier_forward.1']
    #allocation7 [shape = 'u8[262144]{0}', space=vmem, size = 0x40000, scoped, tag = 'input window, operand 3, single buffered']
    #allocation8 [shape = 'u8[512]{0}', space=vmem, size = 0x400, scoped, tag = 'input window, operand 8, single buffered']
    #allocation9 [shape = 's32[1]{0}', space=sflag, size = 0x4, scoped, tag = 'scoped memory for mlp_conclassifier_forward.1']
    #allocation10 [shape = 'u8[16384]{0}', space=vmem, size = 0x4000, scoped, tag = 'input window, operand 9, single buffered']
    #allocation11 [shape = 'u8[4096]{0}', space=vmem, size = 0x1000, scoped, tag = 'output window, operand 0, single buffered']
    #allocation12 [shape = 'u8[4096]{0}', space=vmem, size = 0x1000, scoped, tag = 'output window, operand 1, single buffered']
    #allocation13 [shape = 's32[1]{0}', space=sflag, size = 0x4, scoped, tag = 'scoped memory for mlp_conclassifier_forward.1']
    %20 = vsyncpa [#allocation3], 0
    %21 = vsyncpa [#allocation6], 0
    %22 = vsyncpa [#allocation9], 0
    %23 = vsyncpa [#allocation4], 0
    %24 = vsyncpa [#allocation13], 0
    // Predicated region
    $region2: #{mlp_conclassifier_forward.1} parent=1 // pred_check
      _
    $region3: #{mlp_conclassifier_forward.1} parent=1 // pred_check_branch
      %26 = sbr.rel (0) target = $region5
    $region4: #{mlp_conclassifier_forward.1} parent=1 // pred_region
      %s28 = ssub.s32 128, 128
      %29 = vsyncadd [#allocation3], %s28
      %s31 = sshll.u32 [#allocation2], 4
      %s32 = int_to_ptr.vmem [resolvable:$true] %s31
      %34 = dma.hbm_to_vmem [thread:$0]  %s0, 128, %s32, [#allocation3]
    $region5: #{mlp_conclassifier_forward.1} parent=1 // pred_fallthru
      _
    // Predicated region
    $region6: #{mlp_conclassifier_forward.1} parent=1 // pred_check
      _
    $region7: #{mlp_conclassifier_forward.1} parent=1 // pred_check_branch
      %36 = sbr.rel (0) target = $region9
    $region8: #{mlp_conclassifier_forward.1} parent=1 // pred_region
      _
    $region9: #{mlp_conclassifier_forward.1} parent=1 // pred_fallthru
      _
    // Predicated region
    $region10: #{mlp_conclassifier_forward.1} parent=1 // pred_check
      _
    $region11: #{mlp_conclassifier_forward.1} parent=1 // pred_check_branch
      %38 = sbr.rel (0) target = $region13
    $region12: #{mlp_conclassifier_forward.1} parent=1 // pred_region
      %s40 = ssub.s32 64, 64
      %41 = vsyncadd [#allocation6], %s40
      %s43 = sshll.u32 [#allocation5], 4
      %s44 = int_to_ptr.vmem [resolvable:$true] %s43
      %46 = dma.hbm_to_vmem [thread:$0]  %s2, 64, %s44, [#allocation6]
    $region13: #{mlp_conclassifier_forward.1} parent=1 // pred_fallthru
      _
    // Predicated region
    $region14: #{mlp_conclassifier_forward.1} parent=1 // pred_check
      _
    $region15: #{mlp_conclassifier_forward.1} parent=1 // pred_check_branch
      %48 = sbr.rel (0) target = $region17
    $region16: #{mlp_conclassifier_forward.1} parent=1 // pred_region
      %s50 = ssub.s32 8192, 8192
      %51 = vsyncadd [#allocation6], %s50
      %s52 = sshll.u32 [#allocation7], 4
      %s53 = int_to_ptr.vmem [resolvable:$true] %s52
      %58 = dma.hbm_to_vmem [thread:$0]  %s3, 8192, %s53, [#allocation6], 128, 128, 8
    $region17: #{mlp_conclassifier_forward.1} parent=1 // pred_fallthru
      _
    // Predicated region
    $region18: #{mlp_conclassifier_forward.1} parent=1 // pred_check
      _
    $region19: #{mlp_conclassifier_forward.1} parent=1 // pred_check_branch
      %60 = sbr.rel (0) target = $region21
    $region20: #{mlp_conclassifier_forward.1} parent=1 // pred_region
      _
    $region21: #{mlp_conclassifier_forward.1} parent=1 // pred_fallthru
      _
    // Predicated region
    $region22: #{mlp_conclassifier_forward.1} parent=1 // pred_check
      _
    $region23: #{mlp_conclassifier_forward.1} parent=1 // pred_check_branch
      %62 = sbr.rel (0) target = $region25
    $region24: #{mlp_conclassifier_forward.1} parent=1 // pred_region
      _
    $region25: #{mlp_conclassifier_forward.1} parent=1 // pred_fallthru
      _
    // Predicated region
    $region26: #{mlp_conclassifier_forward.1} parent=1 // pred_check
      _
    $region27: #{mlp_conclassifier_forward.1} parent=1 // pred_check_branch
      %64 = sbr.rel (0) target = $region29
    $region28: #{mlp_conclassifier_forward.1} parent=1 // pred_region
      _
    $region29: #{mlp_conclassifier_forward.1} parent=1 // pred_fallthru
      _
    // Predicated region
    $region30: #{mlp_conclassifier_forward.1} parent=1 // pred_check
      _
    $region31: #{mlp_conclassifier_forward.1} parent=1 // pred_check_branch
      %66 = sbr.rel (0) target = $region33
    $region32: #{mlp_conclassifier_forward.1} parent=1 // pred_region
      _
    $region33: #{mlp_conclassifier_forward.1} parent=1 // pred_fallthru
      _
    // Predicated region
    $region34: #{mlp_conclassifier_forward.1} parent=1 // pred_check
      _
    $region35: #{mlp_conclassifier_forward.1} parent=1 // pred_check_branch
      %68 = sbr.rel (0) target = $region37
    $region36: #{mlp_conclassifier_forward.1} parent=1 // pred_region
      %s70 = ssub.s32 16, 16
      %71 = vsyncadd [#allocation9], %s70
      %s73 = sshll.u32 [#allocation8], 4
      %s74 = int_to_ptr.vmem [resolvable:$true] %s73
      %76 = dma.hbm_to_vmem [thread:$0]  %s8, 16, %s74, [#allocation9]
    $region37: #{mlp_conclassifier_forward.1} parent=1 // pred_fallthru
      _
    // Predicated region
    $region38: #{mlp_conclassifier_forward.1} parent=1 // pred_check
      _
    $region39: #{mlp_conclassifier_forward.1} parent=1 // pred_check_branch
      %78 = sbr.rel (0) target = $region41
    $region40: #{mlp_conclassifier_forward.1} parent=1 // pred_region
      %s80 = ssub.s32 512, 512
      %81 = vsyncadd [#allocation9], %s80
      %s82 = sshll.u32 [#allocation10], 4
      %s83 = int_to_ptr.vmem [resolvable:$true] %s82
      %88 = dma.hbm_to_vmem [thread:$0]  %s9, 512, %s83, [#allocation9], 128, 128, 8
    $region41: #{mlp_conclassifier_forward.1} parent=1 // pred_fallthru
      _
    // Predicated region
    $region42: #{mlp_conclassifier_forward.1} parent=1 // pred_check
      _
    $region43: #{mlp_conclassifier_forward.1} parent=1 // pred_check_branch
      %90 = sbr.rel (0) target = $region45
    $region44: #{mlp_conclassifier_forward.1} parent=1 // pred_region
      _
    $region45: #{mlp_conclassifier_forward.1} parent=1 // pred_fallthru
      _
    // Predicated region
    $region46: #{mlp_conclassifier_forward.1} parent=1 // pred_check
      _
    $region47: #{mlp_conclassifier_forward.1} parent=1 // pred_check_branch
      %92 = sbr.rel (0) target = $region49
    $region48: #{mlp_conclassifier_forward.1} parent=1 // pred_region
      _
    $region49: #{mlp_conclassifier_forward.1} parent=1 // pred_fallthru
      _
    // Predicated region
    $region50: #{mlp_conclassifier_forward.1} parent=1 // pred_check
      _
    $region51: #{mlp_conclassifier_forward.1} parent=1 // pred_check_branch
      %94 = sbr.rel (0) target = $region53
    $region52: #{mlp_conclassifier_forward.1} parent=1 // pred_region
      _
    $region53: #{mlp_conclassifier_forward.1} parent=1 // pred_fallthru
      _
    // Predicated region
    $region54: #{mlp_conclassifier_forward.1} parent=1 // pred_check
      _
    $region55: #{mlp_conclassifier_forward.1} parent=1 // pred_check_branch
      %96 = sbr.rel (0) target = $region57
    $region56: #{mlp_conclassifier_forward.1} parent=1 // pred_region
      %97 = dma.done [#allocation3], 128
    $region57: #{mlp_conclassifier_forward.1} parent=1 // pred_fallthru
      _
    // Predicated region
    $region58: #{mlp_conclassifier_forward.1} parent=1 // pred_check
      _
    $region59: #{mlp_conclassifier_forward.1} parent=1 // pred_check_branch
      %99 = sbr.rel (0) target = $region61
    $region60: #{mlp_conclassifier_forward.1} parent=1 // pred_region
      %100 = dma.done [#allocation6], 64
    $region61: #{mlp_conclassifier_forward.1} parent=1 // pred_fallthru
      _
    // Predicated region
    $region62: #{mlp_conclassifier_forward.1} parent=1 // pred_check
      _
    $region63: #{mlp_conclassifier_forward.1} parent=1 // pred_check_branch
      %102 = sbr.rel (0) target = $region65
    $region64: #{mlp_conclassifier_forward.1} parent=1 // pred_region
      %103 = dma.done [#allocation6], 8192
    $region65: #{mlp_conclassifier_forward.1} parent=1 // pred_fallthru
      _
    // Predicated region
    $region66: #{mlp_conclassifier_forward.1} parent=1 // pred_check
      _
    $region67: #{mlp_conclassifier_forward.1} parent=1 // pred_check_branch
      %105 = sbr.rel (0) target = $region69
    $region68: #{mlp_conclassifier_forward.1} parent=1 // pred_region
      %106 = dma.done [#allocation9], 16
    $region69: #{mlp_conclassifier_forward.1} parent=1 // pred_fallthru
      _
    // Predicated region
    $region70: #{mlp_conclassifier_forward.1} parent=1 // pred_check
      _
    $region71: #{mlp_conclassifier_forward.1} parent=1 // pred_check_branch
      %108 = sbr.rel (0) target = $region73
    $region72: #{mlp_conclassifier_forward.1} parent=1 // pred_region
      %109 = dma.done [#allocation9], 512
    $region73: #{mlp_conclassifier_forward.1} parent=1 // pred_fallthru
      _
    %v110 = vld [vmem:[#allocation2] sm:$0xff]
    %v111 = vld [vmem:[%s1] sm:$0xff]
    %v112 = vld [vmem:[%s1 + $0x8] sm:$0xff]
    %v113 = vld [vmem:[%s1 + $0x10] sm:$0xff]
    %v114 = vld [vmem:[%s1 + $0x18] sm:$0xff]
    %v115 = vld [vmem:[%s1 + $0x20] sm:$0xff]
    %v116 = vld [vmem:[%s1 + $0x28] sm:$0xff]
    %v117 = vld [vmem:[%s1 + $0x30] sm:$0xff]
    %v118 = vld [vmem:[%s1 + $0x38] sm:$0xff]
    %v119 = vld [vmem:[%s1 + $0x40] sm:$0xff]
    %v120 = vld [vmem:[%s1 + $0x48] sm:$0xff]
    %v121 = vld [vmem:[%s1 + $0x50] sm:$0xff]
    %v122 = vld [vmem:[%s1 + $0x58] sm:$0xff]
    %v123 = vld [vmem:[%s1 + $0x60] sm:$0xff]
    %v124 = vld [vmem:[%s1 + $0x68] sm:$0xff]
    %v125 = vld [vmem:[%s1 + $0x70] sm:$0xff]
    %v126 = vld [vmem:[%s1 + $0x78] sm:$0xff]
    %v127 = vld [vmem:[%s1 + $0x80] sm:$0xff]
    %v128 = vld [vmem:[%s1 + $0x88] sm:$0xff]
    %v129 = vld [vmem:[%s1 + $0x90] sm:$0xff]
    %v130 = vld [vmem:[%s1 + $0x98] sm:$0xff]
    %v131 = vld [vmem:[%s1 + $0xa0] sm:$0x1]
    %v132 = vld [vmem:[%s1 + $0xa8] sm:$0x1]
    %v133 = vld [vmem:[%s1 + $0xb0] sm:$0x1]
    %v134 = vld [vmem:[%s1 + $0xb8] sm:$0x1]
    %v135 = vld [vmem:[#allocation5] sm:$0xf]
    %v137 = vlaneseq
    %v138 = vshrl.u32 %v137, 7
    %v139 = vsub.s32 0, %v138
    %v140 = vrot.slane %v135, %v139
    %v141 = vlaneseq
    %v142 = vshrl.u32 %v141, 7
    %v143 = vsub.s32 1, %v142
    %v144 = vrot.slane %v135, %v143
    %v145 = vlaneseq
    %v146 = vshrl.u32 %v145, 7
    %v147 = vsub.s32 2, %v146
    %v148 = vrot.slane %v135, %v147
    %v149 = vlaneseq
    %v150 = vshrl.u32 %v149, 7
    %v151 = vsub.s32 3, %v150
    %v152 = vrot.slane %v135, %v151
    %vm157 = vcmask 334848
    %v159 = vsel %vm157, %v110, 0
    %vm161 = vcmask 1040384
    %v163 = vsel %vm161, %v131, 0
    %v166 = vsel %vm161, %v132, 0
    %v169 = vsel %vm161, %v133, 0
    %v172 = vsel %vm161, %v134, 0
    %174 = vmatprep.subr.mxu0 %v112
    %175 = vmatpush1.msra.mxu0 %v111
    %176 = vmatprep.subr.mxu0 %v116
    %177 = vmatpush1.msra.mxu0 %v115
    %178 = vmatprep.subr.mxu0 %v120
    %179 = vmatpush1.msra.mxu0 %v119
    %180 = vmatprep.subr.mxu0 %v124
    %181 = vmatpush1.msra.mxu0 %v123
    %182 = vmatprep.subr.mxu0 %v128
    %183 = vmatpush1.msra.mxu0 %v127
    %184 = vmatprep.subr.mxu0 %v166
    %185 = vmatpush1.msra.mxu0 %v163
    %186 = vmatprep.subr.mxu0 0.0
    %187 = vmatpush1.msra.mxu0 0.0
    %188 = vmatprep.subr.mxu0 0.0
    %189 = vmatpush1.msra.mxu0 0.0
    %190 = vmatprep.subr.mxu0 0.0
    %191 = vmatpush1.msra.mxu0 0.0
    %192 = vmatprep.subr.mxu0 0.0
    %193 = vmatpush1.msra.mxu0 0.0
    %194 = vmatprep.subr.mxu0 0.0
    %195 = vmatpush1.msra.mxu0 0.0
    %196 = vmatprep.subr.mxu0 0.0
    %197 = vmatpush1.msra.mxu0 0.0
    %198 = vmatprep.subr.mxu0 0.0
    %199 = vmatpush1.msra.mxu0 0.0
    %200 = vmatprep.subr.mxu0 0.0
    %201 = vmatpush1.msra.mxu0 0.0
    %202 = vmatprep.subr.mxu0 0.0
    %203 = vmatpush1.msra.mxu0 0.0
    %204 = vmatprep.subr.mxu0 0.0
    %205 = vmatpush1.msra.mxu0 0.0
    %206 = vmatprep.subr.mxu0 0.0
    %207 = vmatpush1.msra.mxu0 0.0
    %208 = vmatprep.subr.mxu0 0.0
    %209 = vmatpush1.msra.mxu0 0.0
    %210 = vmatprep.subr.mxu0 0.0
    %211 = vmatpush1.msra.mxu0 0.0
    %212 = vmatprep.subr.mxu0 0.0
    %213 = vmatpush1.msra.mxu0 0.0
    %214 = vmatprep.subr.mxu0 0.0
    %215 = vmatpush1.msra.mxu0 0.0
    %216 = vmatprep.subr.mxu0 0.0
    %217 = vmatpush1.msra.mxu0 0.0
    %218 = vmatprep.subr.mxu0 0.0
    %219 = vmatpush1.msra.mxu0 0.0
    %220 = vmatprep.subr.mxu0 0.0
    %221 = vmatpush1.msra.mxu0 0.0
    %222 = vmatprep.subr.mxu0 0.0
    %223 = vmatpush1.msra.mxu0 0.0
    %224 = vmatprep.subr.mxu0 0.0
    %225 = vmatpush1.msra.mxu0 0.0
    %226 = vmatprep.subr.mxu0 0.0
    %227 = vmatpush1.msra.mxu0 0.0
    %228 = vmatprep.subr.mxu0 0.0
    %229 = vmatpush1.msra.mxu0 0.0
    %230 = vmatprep.subr.mxu0 0.0
    %231 = vmatpush1.msra.mxu0 0.0
    %232 = vmatprep.subr.mxu0 0.0
    %233 = vmatpush1.msra.mxu0 0.0
    %234 = vmatprep.subr.mxu0 0.0
    %235 = vmatpush1.msra.mxu0 0.0
    %236 = vmatprep.subr.mxu0 0.0
    %237 = vmatpush1.msra.mxu0 0.0
    %238 = vmatprep.mubr.f32.mxu0 0.0
    %239 = vmatmul.mubr.f32.gmra.mrb[0].mxu0 %v159
    %v240 = vpop.f32.mrb[0].mxu0
    %v241 = vadd.f32 %v140, %v240
    %v242 = vpop.f32.mrb[0].mxu0
    %v243 = vadd.f32 %v144, %v242
    %244 = vdwg.mxu0
    %245 = vmatprep.subr.mxu0 %v114
    %246 = vmatpush1.msra.mxu0 %v113
    %247 = vmatprep.subr.mxu0 %v118
    %248 = vmatpush1.msra.mxu0 %v117
    %249 = vmatprep.subr.mxu0 %v122
    %250 = vmatpush1.msra.mxu0 %v121
    %251 = vmatprep.subr.mxu0 %v126
    %252 = vmatpush1.msra.mxu0 %v125
    %253 = vmatprep.subr.mxu0 %v130
    %254 = vmatpush1.msra.mxu0 %v129
    %255 = vmatprep.subr.mxu0 %v172
    %256 = vmatpush1.msra.mxu0 %v169
    %257 = vmatprep.subr.mxu0 0.0
    %258 = vmatpush1.msra.mxu0 0.0
    %259 = vmatprep.subr.mxu0 0.0
    %260 = vmatpush1.msra.mxu0 0.0
    %261 = vmatprep.subr.mxu0 0.0
    %262 = vmatpush1.msra.mxu0 0.0
    %263 = vmatprep.subr.mxu0 0.0
    %264 = vmatpush1.msra.mxu0 0.0
    %265 = vmatprep.subr.mxu0 0.0
    %266 = vmatpush1.msra.mxu0 0.0
    %267 = vmatprep.subr.mxu0 0.0
    %268 = vmatpush1.msra.mxu0 0.0
    %269 = vmatprep.subr.mxu0 0.0
    %270 = vmatpush1.msra.mxu0 0.0
    %271 = vmatprep.subr.mxu0 0.0
    %272 = vmatpush1.msra.mxu0 0.0
    %273 = vmatprep.subr.mxu0 0.0
    %274 = vmatpush1.msra.mxu0 0.0
    %275 = vmatprep.subr.mxu0 0.0
    %276 = vmatpush1.msra.mxu0 0.0
    %277 = vmatprep.subr.mxu0 0.0
    %278 = vmatpush1.msra.mxu0 0.0
    %279 = vmatprep.subr.mxu0 0.0
    %280 = vmatpush1.msra.mxu0 0.0
    %281 = vmatprep.subr.mxu0 0.0
    %282 = vmatpush1.msra.mxu0 0.0
    %283 = vmatprep.subr.mxu0 0.0
    %284 = vmatpush1.msra.mxu0 0.0
    %285 = vmatprep.subr.mxu0 0.0
    %286 = vmatpush1.msra.mxu0 0.0
    %287 = vmatprep.subr.mxu0 0.0
    %288 = vmatpush1.msra.mxu0 0.0
    %289 = vmatprep.subr.mxu0 0.0
    %290 = vmatpush1.msra.mxu0 0.0
    %291 = vmatprep.subr.mxu0 0.0
    %292 = vmatpush1.msra.mxu0 0.0
    %293 = vmatprep.subr.mxu0 0.0
    %294 = vmatpush1.msra.mxu0 0.0
    %295 = vmatprep.subr.mxu0 0.0
    %296 = vmatpush1.msra.mxu0 0.0
    %297 = vmatprep.subr.mxu0 0.0
    %298 = vmatpush1.msra.mxu0 0.0
    %299 = vmatprep.subr.mxu0 0.0
    %300 = vmatpush1.msra.mxu0 0.0
    %301 = vmatprep.subr.mxu0 0.0
    %302 = vmatpush1.msra.mxu0 0.0
    %303 = vmatprep.subr.mxu0 0.0
    %304 = vmatpush1.msra.mxu0 0.0
    %305 = vmatprep.subr.mxu0 0.0
    %306 = vmatpush1.msra.mxu0 0.0
    %307 = vmatprep.subr.mxu0 0.0
    %308 = vmatpush1.msra.mxu0 0.0
    %309 = vmatprep.mubr.f32.mxu0 0.0
    %310 = vmatmul.mubr.f32.gmra.mrb[0].mxu0 %v159
    %v311 = vpop.f32.mrb[0].mxu0
    %v312 = vadd.f32 %v148, %v311
    %v313 = vpop.f32.mrb[0].mxu0
    %v314 = vadd.f32 %v152, %v313
    %315 = vdwg.mxu0
    %v316 = vmax.f32 %v241, 0.0
    %v317 = vmax.f32 %v243, 0.0
    %v318 = vmax.f32 %v312, 0.0
    %v319 = vmax.f32 %v314, 0.0
    %v320 = vld [vmem:[#allocation7] sm:$0xff]
    %v321 = vld [vmem:[#allocation7 + $0x8] sm:$0xff]
    %v322 = vld [vmem:[#allocation7 + $0x10] sm:$0xff]
    %v323 = vld [vmem:[#allocation7 + $0x18] sm:$0xff]
    %v324 = vld [vmem:[#allocation7 + $0x20] sm:$0xff]
    %v325 = vld [vmem:[#allocation7 + $0x28] sm:$0xff]
    %v326 = vld [vmem:[#allocation7 + $0x30] sm:$0xff]
    %v327 = vld [vmem:[#allocation7 + $0x38] sm:$0xff]
    %v328 = vld [vmem:[#allocation7 + $0x40] sm:$0xff]
    %v329 = vld [vmem:[#allocation7 + $0x48] sm:$0xff]
    %v330 = vld [vmem:[#allocation7 + $0x50] sm:$0xff]
    %v331 = vld [vmem:[#allocation7 + $0x58] sm:$0xff]
    %v332 = vld [vmem:[#allocation7 + $0x60] sm:$0xff]
    %v333 = vld [vmem:[#allocation7 + $0x68] sm:$0xff]
    %v334 = vld [vmem:[#allocation7 + $0x70] sm:$0xff]
    %v335 = vld [vmem:[#allocation7 + $0x78] sm:$0xff]
    %v336 = vld [vmem:[#allocation7 + $0x80] sm:$0xff]
    %v337 = vld [vmem:[#allocation7 + $0x88] sm:$0xff]
    %v338 = vld [vmem:[#allocation7 + $0x90] sm:$0xff]
    %v339 = vld [vmem:[#allocation7 + $0x98] sm:$0xff]
    %v340 = vld [vmem:[#allocation7 + $0xa0] sm:$0xff]
    %v341 = vld [vmem:[#allocation7 + $0xa8] sm:$0xff]
    %v342 = vld [vmem:[#allocation7 + $0xb0] sm:$0xff]
    %v343 = vld [vmem:[#allocation7 + $0xb8] sm:$0xff]
    %v344 = vld [vmem:[#allocation7 + $0xc0] sm:$0xff]
    %v345 = vld [vmem:[#allocation7 + $0xc8] sm:$0xff]
    %v346 = vld [vmem:[#allocation7 + $0xd0] sm:$0xff]
    %v347 = vld [vmem:[#allocation7 + $0xd8] sm:$0xff]
    %v348 = vld [vmem:[#allocation7 + $0xe0] sm:$0xff]
    %v349 = vld [vmem:[#allocation7 + $0xe8] sm:$0xff]
    %v350 = vld [vmem:[#allocation7 + $0xf0] sm:$0xff]
    %v351 = vld [vmem:[#allocation7 + $0xf8] sm:$0xff]
    %v352 = vld [vmem:[#allocation7 + $0x100] sm:$0xff]
    %v353 = vld [vmem:[#allocation7 + $0x108] sm:$0xff]
    %v354 = vld [vmem:[#allocation7 + $0x110] sm:$0xff]
    %v355 = vld [vmem:[#allocation7 + $0x118] sm:$0xff]
    %v356 = vld [vmem:[#allocation7 + $0x120] sm:$0xff]
    %v357 = vld [vmem:[#allocation7 + $0x128] sm:$0xff]
    %v358 = vld [vmem:[#allocation7 + $0x130] sm:$0xff]
    %v359 = vld [vmem:[#allocation7 + $0x138] sm:$0xff]
    %v360 = vld [vmem:[#allocation7 + $0x140] sm:$0xff]
    %v361 = vld [vmem:[#allocation7 + $0x148] sm:$0xff]
    %v362 = vld [vmem:[#allocation7 + $0x150] sm:$0xff]
    %v363 = vld [vmem:[#allocation7 + $0x158] sm:$0xff]
    %v364 = vld [vmem:[#allocation7 + $0x160] sm:$0xff]
    %v365 = vld [vmem:[#allocation7 + $0x168] sm:$0xff]
    %v366 = vld [vmem:[#allocation7 + $0x170] sm:$0xff]
    %v367 = vld [vmem:[#allocation7 + $0x178] sm:$0xff]
    %v368 = vld [vmem:[#allocation7 + $0x180] sm:$0xff]
    %v369 = vld [vmem:[#allocation7 + $0x188] sm:$0xff]
    %v370 = vld [vmem:[#allocation7 + $0x190] sm:$0xff]
    %v371 = vld [vmem:[#allocation7 + $0x198] sm:$0xff]
    %v372 = vld [vmem:[#allocation7 + $0x1a0] sm:$0xff]
    %v373 = vld [vmem:[#allocation7 + $0x1a8] sm:$0xff]
    %v374 = vld [vmem:[#allocation7 + $0x1b0] sm:$0xff]
    %v375 = vld [vmem:[#allocation7 + $0x1b8] sm:$0xff]
    %v376 = vld [vmem:[#allocation7 + $0x1c0] sm:$0xff]
    %v377 = vld [vmem:[#allocation7 + $0x1c8] sm:$0xff]
    %v378 = vld [vmem:[#allocation7 + $0x1d0] sm:$0xff]
    %v379 = vld [vmem:[#allocation7 + $0x1d8] sm:$0xff]
    %v380 = vld [vmem:[#allocation7 + $0x1e0] sm:$0xff]
    %v381 = vld [vmem:[#allocation7 + $0x1e8] sm:$0xff]
    %v382 = vld [vmem:[#allocation7 + $0x1f0] sm:$0xff]
    %v383 = vld [vmem:[#allocation7 + $0x1f8] sm:$0xff]
    %v384 = vld [vmem:[%s4] sm:$0x1]
    %v386 = vlaneseq
    %v387 = vshrl.u32 %v386, 7
    %v388 = vsub.s32 0, %v387
    %v389 = vrot.slane %v384, %v388
    %391 = vmatprep.subr.mxu0 0.0
    %392 = vmatpush1.msra.mxu0 %v320
    %393 = vmatprep.subr.mxu0 0.0
    %394 = vmatpush1.msra.mxu0 %v321
    %395 = vmatprep.subr.mxu0 0.0
    %396 = vmatpush1.msra.mxu0 %v322
    %397 = vmatprep.subr.mxu0 0.0
    %398 = vmatpush1.msra.mxu0 %v323
    %399 = vmatprep.subr.mxu0 0.0
    %400 = vmatpush1.msra.mxu0 %v324
    %401 = vmatprep.subr.mxu0 0.0
    %402 = vmatpush1.msra.mxu0 %v325
    %403 = vmatprep.subr.mxu0 0.0
    %404 = vmatpush1.msra.mxu0 %v326
    %405 = vmatprep.subr.mxu0 0.0
    %406 = vmatpush1.msra.mxu0 %v327
    %407 = vmatprep.subr.mxu0 0.0
    %408 = vmatpush1.msra.mxu0 %v328
    %409 = vmatprep.subr.mxu0 0.0
    %410 = vmatpush1.msra.mxu0 %v329
    %411 = vmatprep.subr.mxu0 0.0
    %412 = vmatpush1.msra.mxu0 %v330
    %413 = vmatprep.subr.mxu0 0.0
    %414 = vmatpush1.msra.mxu0 %v331
    %415 = vmatprep.subr.mxu0 0.0
    %416 = vmatpush1.msra.mxu0 %v332
    %417 = vmatprep.subr.mxu0 0.0
    %418 = vmatpush1.msra.mxu0 %v333
    %419 = vmatprep.subr.mxu0 0.0
    %420 = vmatpush1.msra.mxu0 %v334
    %421 = vmatprep.subr.mxu0 0.0
    %422 = vmatpush1.msra.mxu0 %v335
    %423 = vmatprep.subr.mxu0 0.0
    %424 = vmatpush1.msra.mxu0 %v336
    %425 = vmatprep.subr.mxu0 0.0
    %426 = vmatpush1.msra.mxu0 %v337
    %427 = vmatprep.subr.mxu0 0.0
    %428 = vmatpush1.msra.mxu0 %v338
    %429 = vmatprep.subr.mxu0 0.0
    %430 = vmatpush1.msra.mxu0 %v339
    %431 = vmatprep.subr.mxu0 0.0
    %432 = vmatpush1.msra.mxu0 %v340
    %433 = vmatprep.subr.mxu0 0.0
    %434 = vmatpush1.msra.mxu0 %v341
    %435 = vmatprep.subr.mxu0 0.0
    %436 = vmatpush1.msra.mxu0 %v342
    %437 = vmatprep.subr.mxu0 0.0
    %438 = vmatpush1.msra.mxu0 %v343
    %439 = vmatprep.subr.mxu0 0.0
    %440 = vmatpush1.msra.mxu0 %v344
    %441 = vmatprep.subr.mxu0 0.0
    %442 = vmatpush1.msra.mxu0 %v345
    %443 = vmatprep.subr.mxu0 0.0
    %444 = vmatpush1.msra.mxu0 %v346
    %445 = vmatprep.subr.mxu0 0.0
    %446 = vmatpush1.msra.mxu0 %v347
    %447 = vmatprep.subr.mxu0 0.0
    %448 = vmatpush1.msra.mxu0 %v348
    %449 = vmatprep.subr.mxu0 0.0
    %450 = vmatpush1.msra.mxu0 %v349
    %451 = vmatprep.subr.mxu0 0.0
    %452 = vmatpush1.msra.mxu0 %v350
    %453 = vmatprep.subr.mxu0 0.0
    %454 = vmatpush1.msra.mxu0 %v351
    %455 = vmatprep.mubr.f32.mxu0 %v317
    %456 = vmatmul.mubr.f32.gmra.mrb[0].mxu0 %v316
    %v457 = vpop.f32.mrb[0].mxu0
    %v458 = vadd.f32 %v389, %v457
    %v459 = vpop.f32.mrb[0].mxu0
    %460 = vdwg.mxu0
    %461 = vmatprep.subr.mxu0 0.0
    %462 = vmatpush1.msra.mxu0 %v352
    %463 = vmatprep.subr.mxu0 0.0
    %464 = vmatpush1.msra.mxu0 %v353
    %465 = vmatprep.subr.mxu0 0.0
    %466 = vmatpush1.msra.mxu0 %v354
    %467 = vmatprep.subr.mxu0 0.0
    %468 = vmatpush1.msra.mxu0 %v355
    %469 = vmatprep.subr.mxu0 0.0
    %470 = vmatpush1.msra.mxu0 %v356
    %471 = vmatprep.subr.mxu0 0.0
    %472 = vmatpush1.msra.mxu0 %v357
    %473 = vmatprep.subr.mxu0 0.0
    %474 = vmatpush1.msra.mxu0 %v358
    %475 = vmatprep.subr.mxu0 0.0
    %476 = vmatpush1.msra.mxu0 %v359
    %477 = vmatprep.subr.mxu0 0.0
    %478 = vmatpush1.msra.mxu0 %v360
    %479 = vmatprep.subr.mxu0 0.0
    %480 = vmatpush1.msra.mxu0 %v361
    %481 = vmatprep.subr.mxu0 0.0
    %482 = vmatpush1.msra.mxu0 %v362
    %483 = vmatprep.subr.mxu0 0.0
    %484 = vmatpush1.msra.mxu0 %v363
    %485 = vmatprep.subr.mxu0 0.0
    %486 = vmatpush1.msra.mxu0 %v364
    %487 = vmatprep.subr.mxu0 0.0
    %488 = vmatpush1.msra.mxu0 %v365
    %489 = vmatprep.subr.mxu0 0.0
    %490 = vmatpush1.msra.mxu0 %v366
    %491 = vmatprep.subr.mxu0 0.0
    %492 = vmatpush1.msra.mxu0 %v367
    %493 = vmatprep.subr.mxu0 0.0
    %494 = vmatpush1.msra.mxu0 %v368
    %495 = vmatprep.subr.mxu0 0.0
    %496 = vmatpush1.msra.mxu0 %v369
    %497 = vmatprep.subr.mxu0 0.0
    %498 = vmatpush1.msra.mxu0 %v370
    %499 = vmatprep.subr.mxu0 0.0
    %500 = vmatpush1.msra.mxu0 %v371
    %501 = vmatprep.subr.mxu0 0.0
    %502 = vmatpush1.msra.mxu0 %v372
    %503 = vmatprep.subr.mxu0 0.0
    %504 = vmatpush1.msra.mxu0 %v373
    %505 = vmatprep.subr.mxu0 0.0
    %506 = vmatpush1.msra.mxu0 %v374
    %507 = vmatprep.subr.mxu0 0.0
    %508 = vmatpush1.msra.mxu0 %v375
    %509 = vmatprep.subr.mxu0 0.0
    %510 = vmatpush1.msra.mxu0 %v376
    %511 = vmatprep.subr.mxu0 0.0
    %512 = vmatpush1.msra.mxu0 %v377
    %513 = vmatprep.subr.mxu0 0.0
    %514 = vmatpush1.msra.mxu0 %v378
    %515 = vmatprep.subr.mxu0 0.0
    %516 = vmatpush1.msra.mxu0 %v379
    %517 = vmatprep.subr.mxu0 0.0
    %518 = vmatpush1.msra.mxu0 %v380
    %519 = vmatprep.subr.mxu0 0.0
    %520 = vmatpush1.msra.mxu0 %v381
    %521 = vmatprep.subr.mxu0 0.0
    %522 = vmatpush1.msra.mxu0 %v382
    %523 = vmatprep.subr.mxu0 0.0
    %524 = vmatpush1.msra.mxu0 %v383
    %525 = vmatprep.mubr.f32.mxu0 %v319
    %526 = vmatmul.mubr.f32.gmra.mrb[0].mxu0 %v318
    %v527 = vpop.f32.mrb[0].mxu0
    %v528 = vadd.f32 %v458, %v527
    %v529 = vpop.f32.mrb[0].mxu0
    %530 = vdwg.mxu0
    %v531 = vmax.f32 %v528, 0.0
    %v532 = vld [vmem:[%s5] sm:$0xff]
    %v533 = vld [vmem:[%s5 + $0x8] sm:$0xff]
    %v534 = vld [vmem:[%s5 + $0x10] sm:$0xff]
    %v535 = vld [vmem:[%s5 + $0x18] sm:$0xff]
    %v536 = vld [vmem:[%s5 + $0x20] sm:$0xff]
    %v537 = vld [vmem:[%s5 + $0x28] sm:$0xff]
    %v538 = vld [vmem:[%s5 + $0x30] sm:$0xff]
    %v539 = vld [vmem:[%s5 + $0x38] sm:$0xff]
    %v540 = vld [vmem:[%s5 + $0x40] sm:$0xff]
    %v541 = vld [vmem:[%s5 + $0x48] sm:$0xff]
    %v542 = vld [vmem:[%s5 + $0x50] sm:$0xff]
    %v543 = vld [vmem:[%s5 + $0x58] sm:$0xff]
    %v544 = vld [vmem:[%s5 + $0x60] sm:$0xff]
    %v545 = vld [vmem:[%s5 + $0x68] sm:$0xff]
    %v546 = vld [vmem:[%s5 + $0x70] sm:$0xff]
    %v547 = vld [vmem:[%s5 + $0x78] sm:$0xff]
    %v548 = vld [vmem:[%s6] sm:$0x1]
    %v550 = vlaneseq
    %v551 = vshrl.u32 %v550, 7
    %v552 = vsub.s32 0, %v551
    %v553 = vrot.slane %v548, %v552
    %555 = vmatprep.subr.mxu0 0.0
    %556 = vmatpush1.msra.mxu0 %v532
    %557 = vmatprep.subr.mxu0 0.0
    %558 = vmatpush1.msra.mxu0 %v533
    %559 = vmatprep.subr.mxu0 0.0
    %560 = vmatpush1.msra.mxu0 %v534
    %561 = vmatprep.subr.mxu0 0.0
    %562 = vmatpush1.msra.mxu0 %v535
    %563 = vmatprep.subr.mxu0 0.0
    %564 = vmatpush1.msra.mxu0 %v536
    %565 = vmatprep.subr.mxu0 0.0
    %566 = vmatpush1.msra.mxu0 %v537
    %567 = vmatprep.subr.mxu0 0.0
    %568 = vmatpush1.msra.mxu0 %v538
    %569 = vmatprep.subr.mxu0 0.0
    %570 = vmatpush1.msra.mxu0 %v539
    %571 = vmatprep.subr.mxu0 0.0
    %572 = vmatpush1.msra.mxu0 %v540
    %573 = vmatprep.subr.mxu0 0.0
    %574 = vmatpush1.msra.mxu0 %v541
    %575 = vmatprep.subr.mxu0 0.0
    %576 = vmatpush1.msra.mxu0 %v542
    %577 = vmatprep.subr.mxu0 0.0
    %578 = vmatpush1.msra.mxu0 %v543
    %579 = vmatprep.subr.mxu0 0.0
    %580 = vmatpush1.msra.mxu0 %v544
    %581 = vmatprep.subr.mxu0 0.0
    %582 = vmatpush1.msra.mxu0 %v545
    %583 = vmatprep.subr.mxu0 0.0
    %584 = vmatpush1.msra.mxu0 %v546
    %585 = vmatprep.subr.mxu0 0.0
    %586 = vmatpush1.msra.mxu0 %v547
    %587 = vmatprep.subr.mxu0 0.0
    %588 = vmatpush1.msra.mxu0 0.0
    %589 = vmatprep.subr.mxu0 0.0
    %590 = vmatpush1.msra.mxu0 0.0
    %591 = vmatprep.subr.mxu0 0.0
    %592 = vmatpush1.msra.mxu0 0.0
    %593 = vmatprep.subr.mxu0 0.0
    %594 = vmatpush1.msra.mxu0 0.0
    %595 = vmatprep.subr.mxu0 0.0
    %596 = vmatpush1.msra.mxu0 0.0
    %597 = vmatprep.subr.mxu0 0.0
    %598 = vmatpush1.msra.mxu0 0.0
    %599 = vmatprep.subr.mxu0 0.0
    %600 = vmatpush1.msra.mxu0 0.0
    %601 = vmatprep.subr.mxu0 0.0
    %602 = vmatpush1.msra.mxu0 0.0
    %603 = vmatprep.subr.mxu0 0.0
    %604 = vmatpush1.msra.mxu0 0.0
    %605 = vmatprep.subr.mxu0 0.0
    %606 = vmatpush1.msra.mxu0 0.0
    %607 = vmatprep.subr.mxu0 0.0
    %608 = vmatpush1.msra.mxu0 0.0
    %609 = vmatprep.subr.mxu0 0.0
    %610 = vmatpush1.msra.mxu0 0.0
    %611 = vmatprep.subr.mxu0 0.0
    %612 = vmatpush1.msra.mxu0 0.0
    %613 = vmatprep.subr.mxu0 0.0
    %614 = vmatpush1.msra.mxu0 0.0
    %615 = vmatprep.subr.mxu0 0.0
    %616 = vmatpush1.msra.mxu0 0.0
    %617 = vmatprep.subr.mxu0 0.0
    %618 = vmatpush1.msra.mxu0 0.0
    %619 = vmatprep.mubr.f32.mxu0 0.0
    %620 = vmatmul.mubr.f32.gmra.mrb[0].mxu0 %v531
    %v621 = vpop.f32.mrb[0].mxu0
    %v622 = vadd.f32 %v553, %v621
    %v623 = vpop.f32.mrb[0].mxu0
    %624 = vdwg.mxu0
    %v625 = vld [vmem:[%s7] sm:$0xff]
    %v626 = vld [vmem:[%s7 + $0x8] sm:$0xff]
    %v627 = vld [vmem:[%s7 + $0x10] sm:$0xff]
    %v628 = vld [vmem:[%s7 + $0x18] sm:$0xff]
    %v629 = vld [vmem:[#allocation8] sm:$0x1]
    %v631 = vlaneseq
    %v632 = vshrl.u32 %v631, 7
    %v633 = vsub.s32 0, %v632
    %v634 = vrot.slane %v629, %v633
    %vm636 = vcmask 261120
    %v638 = vsel %vm636, %v622, 0
    %640 = vmatprep.subr.mxu0 0.0
    %641 = vmatpush1.msra.mxu0 %v625
    %642 = vmatprep.subr.mxu0 0.0
    %643 = vmatpush1.msra.mxu0 %v626
    %644 = vmatprep.subr.mxu0 0.0
    %645 = vmatpush1.msra.mxu0 %v627
    %646 = vmatprep.subr.mxu0 0.0
    %647 = vmatpush1.msra.mxu0 %v628
    %648 = vmatprep.subr.mxu0 0.0
    %649 = vmatpush1.msra.mxu0 0.0
    %650 = vmatprep.subr.mxu0 0.0
    %651 = vmatpush1.msra.mxu0 0.0
    %652 = vmatprep.subr.mxu0 0.0
    %653 = vmatpush1.msra.mxu0 0.0
    %654 = vmatprep.subr.mxu0 0.0
    %655 = vmatpush1.msra.mxu0 0.0
    %656 = vmatprep.subr.mxu0 0.0
    %657 = vmatpush1.msra.mxu0 0.0
    %658 = vmatprep.subr.mxu0 0.0
    %659 = vmatpush1.msra.mxu0 0.0
    %660 = vmatprep.subr.mxu0 0.0
    %661 = vmatpush1.msra.mxu0 0.0
    %662 = vmatprep.subr.mxu0 0.0
    %663 = vmatpush1.msra.mxu0 0.0
    %664 = vmatprep.subr.mxu0 0.0
    %665 = vmatpush1.msra.mxu0 0.0
    %666 = vmatprep.subr.mxu0 0.0
    %667 = vmatpush1.msra.mxu0 0.0
    %668 = vmatprep.subr.mxu0 0.0
    %669 = vmatpush1.msra.mxu0 0.0
    %670 = vmatprep.subr.mxu0 0.0
    %671 = vmatpush1.msra.mxu0 0.0
    %672 = vmatprep.subr.mxu0 0.0
    %673 = vmatpush1.msra.mxu0 0.0
    %674 = vmatprep.subr.mxu0 0.0
    %675 = vmatpush1.msra.mxu0 0.0
    %676 = vmatprep.subr.mxu0 0.0
    %677 = vmatpush1.msra.mxu0 0.0
    %678 = vmatprep.subr.mxu0 0.0
    %679 = vmatpush1.msra.mxu0 0.0
    %680 = vmatprep.subr.mxu0 0.0
    %681 = vmatpush1.msra.mxu0 0.0
    %682 = vmatprep.subr.mxu0 0.0
    %683 = vmatpush1.msra.mxu0 0.0
    %684 = vmatprep.subr.mxu0 0.0
    %685 = vmatpush1.msra.mxu0 0.0
    %686 = vmatprep.subr.mxu0 0.0
    %687 = vmatpush1.msra.mxu0 0.0
    %688 = vmatprep.subr.mxu0 0.0
    %689 = vmatpush1.msra.mxu0 0.0
    %690 = vmatprep.subr.mxu0 0.0
    %691 = vmatpush1.msra.mxu0 0.0
    %692 = vmatprep.subr.mxu0 0.0
    %693 = vmatpush1.msra.mxu0 0.0
    %694 = vmatprep.subr.mxu0 0.0
    %695 = vmatpush1.msra.mxu0 0.0
    %696 = vmatprep.subr.mxu0 0.0
    %697 = vmatpush1.msra.mxu0 0.0
    %698 = vmatprep.subr.mxu0 0.0
    %699 = vmatpush1.msra.mxu0 0.0
    %700 = vmatprep.subr.mxu0 0.0
    %701 = vmatpush1.msra.mxu0 0.0
    %702 = vmatprep.subr.mxu0 0.0
    %703 = vmatpush1.msra.mxu0 0.0
    %704 = vmatprep.mubr.f32.mxu0 0.0
    %705 = vmatmul.mubr.f32.gmra.mrb[0].mxu0 %v638
    %v706 = vpop.f32.mrb[0].mxu0
    %v707 = vadd.f32 %v634, %v706
    %v708 = vpop.f32.mrb[0].mxu0
    %709 = vdwg.mxu0
    %v710 = vmax.f32 %v707, 0.0
    %v711 = vld [vmem:[#allocation10] sm:$0xff]
    %v712 = vld [vmem:[#allocation10 + $0x8] sm:$0xff]
    %v713 = vld [vmem:[#allocation10 + $0x10] sm:$0xff]
    %v714 = vld [vmem:[#allocation10 + $0x18] sm:$0xff]
    %v715 = vld [vmem:[%s10] sm:$0x1]
    %v717 = vlaneseq
    %v718 = vshrl.u32 %v717, 7
    %v719 = vsub.s32 0, %v718
    %v720 = vrot.slane %v715, %v719
    %v723 = vsel %vm636, %v710, 0
    %725 = vmatprep.subr.mxu0 0.0
    %726 = vmatpush1.msra.mxu0 %v711
    %727 = vmatprep.subr.mxu0 0.0
    %728 = vmatpush1.msra.mxu0 %v712
    %729 = vmatprep.subr.mxu0 0.0
    %730 = vmatpush1.msra.mxu0 %v713
    %731 = vmatprep.subr.mxu0 0.0
    %732 = vmatpush1.msra.mxu0 %v714
    %733 = vmatprep.subr.mxu0 0.0
    %734 = vmatpush1.msra.mxu0 0.0
    %735 = vmatprep.subr.mxu0 0.0
    %736 = vmatpush1.msra.mxu0 0.0
    %737 = vmatprep.subr.mxu0 0.0
    %738 = vmatpush1.msra.mxu0 0.0
    %739 = vmatprep.subr.mxu0 0.0
    %740 = vmatpush1.msra.mxu0 0.0
    %741 = vmatprep.subr.mxu0 0.0
    %742 = vmatpush1.msra.mxu0 0.0
    %743 = vmatprep.subr.mxu0 0.0
    %744 = vmatpush1.msra.mxu0 0.0
    %745 = vmatprep.subr.mxu0 0.0
    %746 = vmatpush1.msra.mxu0 0.0
    %747 = vmatprep.subr.mxu0 0.0
    %748 = vmatpush1.msra.mxu0 0.0
    %749 = vmatprep.subr.mxu0 0.0
    %750 = vmatpush1.msra.mxu0 0.0
    %751 = vmatprep.subr.mxu0 0.0
    %752 = vmatpush1.msra.mxu0 0.0
    %753 = vmatprep.subr.mxu0 0.0
    %754 = vmatpush1.msra.mxu0 0.0
    %755 = vmatprep.subr.mxu0 0.0
    %756 = vmatpush1.msra.mxu0 0.0
    %757 = vmatprep.subr.mxu0 0.0
    %758 = vmatpush1.msra.mxu0 0.0
    %759 = vmatprep.subr.mxu0 0.0
    %760 = vmatpush1.msra.mxu0 0.0
    %761 = vmatprep.subr.mxu0 0.0
    %762 = vmatpush1.msra.mxu0 0.0
    %763 = vmatprep.subr.mxu0 0.0
    %764 = vmatpush1.msra.mxu0 0.0
    %765 = vmatprep.subr.mxu0 0.0
    %766 = vmatpush1.msra.mxu0 0.0
    %767 = vmatprep.subr.mxu0 0.0
    %768 = vmatpush1.msra.mxu0 0.0
    %769 = vmatprep.subr.mxu0 0.0
    %770 = vmatpush1.msra.mxu0 0.0
    %771 = vmatprep.subr.mxu0 0.0
    %772 = vmatpush1.msra.mxu0 0.0
    %773 = vmatprep.subr.mxu0 0.0
    %774 = vmatpush1.msra.mxu0 0.0
    %775 = vmatprep.subr.mxu0 0.0
    %776 = vmatpush1.msra.mxu0 0.0
    %777 = vmatprep.subr.mxu0 0.0
    %778 = vmatpush1.msra.mxu0 0.0
    %779 = vmatprep.subr.mxu0 0.0
    %780 = vmatpush1.msra.mxu0 0.0
    %781 = vmatprep.subr.mxu0 0.0
    %782 = vmatpush1.msra.mxu0 0.0
    %783 = vmatprep.subr.mxu0 0.0
    %784 = vmatpush1.msra.mxu0 0.0
    %785 = vmatprep.subr.mxu0 0.0
    %786 = vmatpush1.msra.mxu0 0.0
    %787 = vmatprep.subr.mxu0 0.0
    %788 = vmatpush1.msra.mxu0 0.0
    %789 = vmatprep.mubr.f32.mxu0 0.0
    %790 = vmatmul.mubr.f32.gmra.mrb[0].mxu0 %v723
    %v791 = vpop.f32.mrb[0].mxu0
    %v792 = vadd.f32 %v720, %v791
    %v793 = vpop.f32.mrb[0].mxu0
    %794 = vdwg.mxu0
    %795 = vst.msk [vmem:[#allocation12] sm:$0xff] %vm636, %v792
    %v796 = vld [vmem:[%s11] sm:$0xff]
    %v797 = vld [vmem:[%s11 + $0x8] sm:$0xff]
    %v798 = vld [vmem:[%s11 + $0x10] sm:$0xff]
    %v799 = vld [vmem:[%s11 + $0x18] sm:$0xff]
    %v800 = vld [vmem:[%s12] sm:$0x1]
    %v802 = vlaneseq
    %v803 = vshrl.u32 %v802, 7
    %v804 = vsub.s32 0, %v803
    %v805 = vrot.slane %v800, %v804
    %807 = vmatprep.subr.mxu0 0.0
    %808 = vmatpush1.msra.mxu0 %v796
    %809 = vmatprep.subr.mxu0 0.0
    %810 = vmatpush1.msra.mxu0 %v797
    %811 = vmatprep.subr.mxu0 0.0
    %812 = vmatpush1.msra.mxu0 %v798
    %813 = vmatprep.subr.mxu0 0.0
    %814 = vmatpush1.msra.mxu0 %v799
    %815 = vmatprep.subr.mxu0 0.0
    %816 = vmatpush1.msra.mxu0 0.0
    %817 = vmatprep.subr.mxu0 0.0
    %818 = vmatpush1.msra.mxu0 0.0
    %819 = vmatprep.subr.mxu0 0.0
    %820 = vmatpush1.msra.mxu0 0.0
    %821 = vmatprep.subr.mxu0 0.0
    %822 = vmatpush1.msra.mxu0 0.0
    %823 = vmatprep.subr.mxu0 0.0
    %824 = vmatpush1.msra.mxu0 0.0
    %825 = vmatprep.subr.mxu0 0.0
    %826 = vmatpush1.msra.mxu0 0.0
    %827 = vmatprep.subr.mxu0 0.0
    %828 = vmatpush1.msra.mxu0 0.0
    %829 = vmatprep.subr.mxu0 0.0
    %830 = vmatpush1.msra.mxu0 0.0
    %831 = vmatprep.subr.mxu0 0.0
    %832 = vmatpush1.msra.mxu0 0.0
    %833 = vmatprep.subr.mxu0 0.0
    %834 = vmatpush1.msra.mxu0 0.0
    %835 = vmatprep.subr.mxu0 0.0
    %836 = vmatpush1.msra.mxu0 0.0
    %837 = vmatprep.subr.mxu0 0.0
    %838 = vmatpush1.msra.mxu0 0.0
    %839 = vmatprep.subr.mxu0 0.0
    %840 = vmatpush1.msra.mxu0 0.0
    %841 = vmatprep.subr.mxu0 0.0
    %842 = vmatpush1.msra.mxu0 0.0
    %843 = vmatprep.subr.mxu0 0.0
    %844 = vmatpush1.msra.mxu0 0.0
    %845 = vmatprep.subr.mxu0 0.0
    %846 = vmatpush1.msra.mxu0 0.0
    %847 = vmatprep.subr.mxu0 0.0
    %848 = vmatpush1.msra.mxu0 0.0
    %849 = vmatprep.subr.mxu0 0.0
    %850 = vmatpush1.msra.mxu0 0.0
    %851 = vmatprep.subr.mxu0 0.0
    %852 = vmatpush1.msra.mxu0 0.0
    %853 = vmatprep.subr.mxu0 0.0
    %854 = vmatpush1.msra.mxu0 0.0
    %855 = vmatprep.subr.mxu0 0.0
    %856 = vmatpush1.msra.mxu0 0.0
    %857 = vmatprep.subr.mxu0 0.0
    %858 = vmatpush1.msra.mxu0 0.0
    %859 = vmatprep.subr.mxu0 0.0
    %860 = vmatpush1.msra.mxu0 0.0
    %861 = vmatprep.subr.mxu0 0.0
    %862 = vmatpush1.msra.mxu0 0.0
    %863 = vmatprep.subr.mxu0 0.0
    %864 = vmatpush1.msra.mxu0 0.0
    %865 = vmatprep.subr.mxu0 0.0
    %866 = vmatpush1.msra.mxu0 0.0
    %867 = vmatprep.subr.mxu0 0.0
    %868 = vmatpush1.msra.mxu0 0.0
    %869 = vmatprep.subr.mxu0 0.0
    %870 = vmatpush1.msra.mxu0 0.0
    %871 = vmatprep.mubr.f32.mxu0 0.0
    %872 = vmatmul.mubr.f32.gmra.mrb[0].mxu0 %v638
    %v873 = vpop.f32.mrb[0].mxu0
    %v874 = vadd.f32 %v805, %v873
    %v875 = vpop.f32.mrb[0].mxu0
    %876 = vdwg.mxu0
    %v877 = vmax.f32 %v874, 0.0
    %vm878 = vcmask 39936
    %879 = vst.msk [vmem:[#allocation11] sm:$0xff] %vm878, %v877
    // Predicated region
    $region74: #{mlp_conclassifier_forward.1} parent=1 // pred_check
      _
    $region75: #{mlp_conclassifier_forward.1} parent=1 // pred_check_branch
      %881 = sbr.rel (0) target = $region77
    $region76: #{mlp_conclassifier_forward.1} parent=1 // pred_region
      %s883 = ssub.s32 128, 128
      %884 = vsyncadd [#allocation4], %s883
      %s886 = sshll.u32 [#allocation11], 4
      %s887 = int_to_ptr.vmem [resolvable:$true] %s886
      %889 = dma.vmem_to_hbm [thread:$0]  %s887, 128, %s13, [#allocation4]
    $region77: #{mlp_conclassifier_forward.1} parent=1 // pred_fallthru
      _
    // Predicated region
    $region78: #{mlp_conclassifier_forward.1} parent=1 // pred_check
      _
    $region79: #{mlp_conclassifier_forward.1} parent=1 // pred_check_branch
      %891 = sbr.rel (0) target = $region81
    $region80: #{mlp_conclassifier_forward.1} parent=1 // pred_region
      %s893 = ssub.s32 128, 128
      %894 = vsyncadd [#allocation13], %s893
      %s896 = sshll.u32 [#allocation12], 4
      %s897 = int_to_ptr.vmem [resolvable:$true] %s896
      %899 = dma.vmem_to_hbm [thread:$0]  %s897, 128, %s14, [#allocation13]
    $region81: #{mlp_conclassifier_forward.1} parent=1 // pred_fallthru
      _
    // Predicated region
    $region82: #{mlp_conclassifier_forward.1} parent=1 // pred_check
      _
    $region83: #{mlp_conclassifier_forward.1} parent=1 // pred_check_branch
      %901 = sbr.rel (0) target = $region85
    $region84: #{mlp_conclassifier_forward.1} parent=1 // pred_region
      %902 = dma.done [#allocation4], 128
    $region85: #{mlp_conclassifier_forward.1} parent=1 // pred_fallthru
      _
    // Predicated region
    $region86: #{mlp_conclassifier_forward.1} parent=1 // pred_check
      _
    $region87: #{mlp_conclassifier_forward.1} parent=1 // pred_check_branch
      %904 = sbr.rel (0) target = $region89
    $region88: #{mlp_conclassifier_forward.1} parent=1 // pred_region
      %905 = dma.done [#allocation13], 128
    $region89: #{mlp_conclassifier_forward.1} parent=1 // pred_fallthru
      _
    %906 = vsyncpa [#allocation3], 1
    %907 = vsyncpa [#allocation6], 1
    %908 = vsyncpa [#allocation9], 1
    %909 = vsyncpa [#allocation4], 1
    %910 = vsyncpa [#allocation13], 1

</llo_original>
